<compile_context>
chip_gen: v6e
topology: v6e:2x2x1
jax: 0.10.0
libtpu: 0.0.40
codegen_flags: <defaults>
</compile_context>

<pallas_src>
import math
import functools

import jax
import jax.numpy as jnp
from jax.experimental import pallas as pl
from jax.experimental.pallas import tpu as pltpu


# --------------------------------- tiling helpers ---------------------------------

def _round_up(x, m):
    return ((x + m - 1) // m) * m


def _row_tiling(n):
    """MXU-friendly row (M) tile; returns (tile, padded_n). Tile is never > 512 rows."""
    for t in (512, 256, 128):
        if n % t == 0:
            return t, n
    t = 256 if n > 256 else _round_up(n, 8)
    return t, _round_up(n, t)


def _col_tile(c):
    """Column tile for the fused QKV output (keeps the (D, tn) weight block bounded)."""
    for t in (1536, 1024, 512, 256, 128):
        if c % t == 0:
            return t
    return c


def _ff_tile(f):
    """Chunk size for streaming the FFN hidden dim over an 'arbitrary' grid axis."""
    for t in (1024, 512, 256, 128):
        if f % t == 0:
            return t
    return f


def _vmem_limit_bytes():
    try:
        cap = pltpu.get_tpu_info().vmem_capacity_bytes
    except Exception:
        cap = 128 * 1024 * 1024
    # ~3/4 of physical VMEM: ~48 MiB on v7x (64 MiB), capped at 112 MiB on 128 MiB chips.
    return min((cap * 3) // 4, 112 * 1024 * 1024)


def _layernorm(x, gamma, beta, eps):
    mu = jnp.mean(x, axis=-1, keepdims=True)
    d = x - mu                                    # centered value computed once, reused
    var = jnp.mean(d * d, axis=-1, keepdims=True)
    return d * jax.lax.rsqrt(var + eps) * gamma + beta


# --------------------------- kernel 1: fused QKV projection ---------------------------

def _qkv_kernel(x_ref, w_ref, b_ref, qkv_ref):
    # x: (tm, D) f32 -> cast to bf16 in-kernel (hidden under the MXU matmul)
    x = x_ref[...].astype(w_ref.dtype)
    acc = jnp.dot(x, w_ref[...], preferred_element_type=jnp.float32)
    qkv_ref[...] = (acc + b_ref[...]).astype(qkv_ref.dtype)   # bf16 writeback


# --------------------------- kernel 2: multi-head attention ---------------------------

def _attn_kernel(d_model, nhead, need_weights, qkv_ref, ctx_ref, *maybe_w_ref):
    D, H = d_model, nhead
    Dh = D // H
    qkv = qkv_ref[0]                                  # (L, 3D) bf16, natural layout
    ctx_parts = []
    w_acc = None
    # Static per-head loop: head split is done with lane slices in VMEM (no HBM transposes).
    for h in range(H):
        qh = qkv[:, h * Dh:(h + 1) * Dh]              # 1/sqrt(Dh) pre-folded into Wq
        kh = qkv[:, D + h * Dh:D + (h + 1) * Dh]
        vh = qkv[:, 2 * D + h * Dh:2 * D + (h + 1) * Dh]
        s = jnp.einsum("qd,kd->qk", qh, kh,
                       preferred_element_type=jnp.float32)    # (L, L) f32 on the MXU
        s = s - jnp.max(s, axis=-1, keepdims=True)
        p = jnp.exp(s)
        inv = pl.reciprocal(jnp.sum(p, axis=-1, keepdims=True), approx=True)  # EUP slot
        if need_weights:
            pn = p * inv                                       # normalized probs needed
            ctx_h = jnp.dot(pn.astype(vh.dtype), vh,
                            preferred_element_type=jnp.float32)
            w_acc = pn if w_acc is None else w_acc + pn
        else:
            # normalize after P@V: (L, Dh) multiply instead of (L, L)
            ctx_h = jnp.dot(p.astype(vh.dtype), vh,
                            preferred_element_type=jnp.float32) * inv
        ctx_parts.append(ctx_h)
    ctx = jnp.concatenate(ctx_parts, axis=-1)          # (L, D) f32, lane-dense store
    ctx_ref[0] = ctx.astype(ctx_ref.dtype)
    if need_weights:
        maybe_w_ref[0][0] = w_acc * (1.0 / H)          # average_attn_weights=True


# ----------------------- kernel 3: out-proj + LN1 + FFN + LN2 -------------------------

def _out_ffn_kernel(eps, ctx_ref, x_ref, wo_ref, bo_ref, g1_ref, be1_ref,
                    w1_ref, b1_ref, w2_ref, b2_ref, g2_ref, be2_ref,
                    out_ref, n1_ref, acc_ref):
    f = pl.program_id(1)

    @pl.when(f == 0)
    def _():
        ao = jnp.dot(ctx_ref[...], wo_ref[...],
                     preferred_element_type=jnp.float32) + bo_ref[...]
        s1 = x_ref[...] + ao                            # dropout_attn == identity (eval)
        n1_ref[...] = _layernorm(s1, g1_ref[...], be1_ref[...], eps)
        acc_ref[...] = jnp.zeros_like(acc_ref)

    n1 = n1_ref[...]
    h = jnp.dot(n1.astype(w1_ref.dtype), w1_ref[...],
                preferred_element_type=jnp.float32) + b1_ref[...]
    h = jnp.maximum(h, 0.0)                             # relu; dropout_ffn == identity
    acc_ref[...] += jnp.dot(h.astype(w2_ref.dtype), w2_ref[...],
                            preferred_element_type=jnp.float32)

    @pl.when(f == pl.num_programs(1) - 1)
    def _():
        s2 = n1 + acc_ref[...] + b2_ref[...]
        out_ref[...] = _layernorm(s2, g2_ref[...], be2_ref[...], eps)


# --------------------------------------- wrapper ---------------------------------------

def transformer_encoder_layer(src, prepared, *, nhead, need_weights=True, eps=1e-5):
    """src: (B, L, D) float32, prepared = prepare_params(...).
    Returns (output (B,L,D) f32, attn_weights (B,L,L) f32 or None)."""
    B, L, D = src.shape
    H = nhead
    F = prepared["w1"].shape[1]
    N = B * L
    bf16, f32 = jnp.bfloat16, jnp.float32

    vmem = _vmem_limit_bytes()
    tm, n_pad = _row_tiling(N)
    tn = _col_tile(3 * D)
    tf = _ff_tile(F)

    x2 = src.reshape(N, D)
    x2p = jnp.pad(x2, ((0, n_pad - N), (0, 0))) if n_pad != N else x2

    # ---- fused QKV projection over flattened (B*L) rows, column-split over 3D ------------
    qkv = pl.pallas_call(
        _qkv_kernel,
        grid_spec=pltpu.PrefetchScalarGridSpec(
            num_scalar_prefetch=0,
            grid=(n_pad // tm, (3 * D) // tn),
            in_specs=[
                pl.BlockSpec((tm, D), lambda i, j: (i, 0)),
                pl.BlockSpec((D, tn), lambda i, j: (0, j)),
                pl.BlockSpec((1, tn), lambda i, j: (0, j)),
            ],
            out_specs=pl.BlockSpec((tm, tn), lambda i, j: (i, j)),
        ),
        out_shape=jax.ShapeDtypeStruct((n_pad, 3 * D), bf16),
        compiler_params=pltpu.CompilerParams(
            dimension_semantics=("parallel", "parallel"), vmem_limit_bytes=vmem),
    )(x2p, prepared["w_qkv"], prepared["b_qkv"])

    # natural-layout reshape only (no transpose, no slicing on the common divisible path)
    qkv3 = (qkv[:N] if n_pad != N else qkv).reshape(B, L, 3 * D)

    # ---- attention: grid over batch, heads split in-kernel from the fused qkv block ------
    out_shapes = [jax.ShapeDtypeStruct((B, L, D), bf16)]
    out_specs = [pl.BlockSpec((1, L, D), lambda b: (b, 0, 0))]
    if need_weights:
        out_shapes.append(jax.ShapeDtypeStruct((B, L, L), f32))
        out_specs.append(pl.BlockSpec((1, L, L), lambda b: (b, 0, 0)))

    attn_res = pl.pallas_call(
        functools.partial(_attn_kernel, D, H, need_weights),
        grid_spec=pltpu.PrefetchScalarGridSpec(
            num_scalar_prefetch=0,
            grid=(B,),
            in_specs=[pl.BlockSpec((1, L, 3 * D), lambda b: (b, 0, 0))],
            out_specs=out_specs,
        ),
        out_shape=tuple(out_shapes),
        compiler_params=pltpu.CompilerParams(
            dimension_semantics=("parallel",), vmem_limit_bytes=vmem),
    )(qkv3)

    ctx = attn_res[0]                                   # (B, L, D) bf16, natural layout
    attn_w = attn_res[1] if need_weights else None

    ctx2 = ctx.reshape(N, D)
    ctx2p = jnp.pad(ctx2, ((0, n_pad - N), (0, 0))) if n_pad != N else ctx2

    # ---- output projection + residual + LN1 + FFN (F streamed) + residual + LN2 ----------
    out2 = pl.pallas_call(
        functools.partial(_out_ffn_kernel, eps),
        grid_spec=pltpu.PrefetchScalarGridSpec(
            num_scalar_prefetch=0,
            grid=(n_pad // tm, F // tf),
            in_specs=[
                pl.BlockSpec((tm, D), lambda i, f: (i, 0)),    # attention context (bf16)
                pl.BlockSpec((tm, D), lambda i, f: (i, 0)),    # residual src rows (f32)
                pl.BlockSpec((D, D), lambda i, f: (0, 0)),     # wo (bf16)
                pl.BlockSpec((1, D), lambda i, f: (0, 0)),     # bo
                pl.BlockSpec((1, D), lambda i, f: (0, 0)),     # norm1 gamma
                pl.BlockSpec((1, D), lambda i, f: (0, 0)),     # norm1 beta
                pl.BlockSpec((D, tf), lambda i, f: (0, f)),    # w1 chunk (bf16)
                pl.BlockSpec((1, tf), lambda i, f: (0, f)),    # b1 chunk
                pl.BlockSpec((tf, D), lambda i, f: (f, 0)),    # w2 chunk (bf16)
                pl.BlockSpec((1, D), lambda i, f: (0, 0)),     # b2
                pl.BlockSpec((1, D), lambda i, f: (0, 0)),     # norm2 gamma
                pl.BlockSpec((1, D), lambda i, f: (0, 0)),     # norm2 beta
            ],
            out_specs=pl.BlockSpec((tm, D), lambda i, f: (i, 0)),
            scratch_shapes=[pltpu.VMEM((tm, D), f32),          # n1 (post-LN1)
                            pltpu.VMEM((tm, D), f32)],         # FFN accumulator
        ),
        out_shape=jax.ShapeDtypeStruct((n_pad, D), f32),
        compiler_params=pltpu.CompilerParams(
            dimension_semantics=("parallel", "arbitrary"), vmem_limit_bytes=vmem),
    )(ctx2p, x2p,
      prepared["wo"], prepared["bo"], prepared["g1"], prepared["be1"],
      prepared["w1"], prepared["b1"], prepared["w2"], prepared["b2"],
      prepared["g2"], prepared["be2"])

    out2 = out2[:N] if n_pad != N else out2
    return out2.reshape(B, L, D), attn_w


# ------------------------------------ params / reference -------------------------------

def init_params(key, d_model, nhead, dim_feedforward):
    """Module parameters in f32, weight matrices pre-transposed to (in_dim, out_dim)."""
    keys = jax.random.split(key, 8)
    scale = 0.02
    D, F = d_model, dim_feedforward
    f32 = jnp.float32
    return dict(
        wq=scale * jax.random.normal(keys[0], (D, D), f32),
        wk=scale * jax.random.normal(keys[1], (D, D), f32),
        wv=scale * jax.random.normal(keys[2], (D, D), f32),
        wo=scale * jax.random.normal(keys[3], (D, D), f32),
        w1=scale * jax.random.normal(keys[4], (D, F), f32),
        w2=scale * jax.random.normal(keys[5], (F, D), f32),
        bq=0.01 * jax.random.normal(keys[6], (1, D), f32),
        bk=jnp.zeros((1, D), f32),
        bv=0.01 * jax.random.normal(keys[7], (1, D), f32),
        bo=jnp.zeros((1, D), f32),
        b1=jnp.zeros((1, F), f32),
        b2=jnp.zeros((1, D), f32),
        g1=jnp.ones((1, D), f32),
        be1=jnp.zeros((1, D), f32),
        g2=jnp.ones((1, D), f32),
        be2=jnp.zeros((1, D), f32),
    )


def prepare_params(params, nhead):
    """One-time packing for the kernels: fused bf16 W_qkv/b_qkv with the 1/sqrt(Dh)
    attention scale pre-folded into Wq/bq, bf16 weight matrices, f32 biases/LN params."""
    D = params["wq"].shape[0]
    scale = 1.0 / math.sqrt(D // nhead)
    bf16, f32 = jnp.bfloat16, jnp.float32
    w_qkv = jnp.concatenate([params["wq"] * scale, params["wk"], params["wv"]],
                            axis=1).astype(bf16)
    b_qkv = jnp.concatenate([params["bq"] * scale, params["bk"], params["bv"]],
                            axis=1).astype(f32)
    return dict(
        w_qkv=w_qkv, b_qkv=b_qkv,
        wo=params["wo"].astype(bf16), bo=params["bo"].astype(f32),
        w1=params["w1"].astype(bf16), b1=params["b1"].astype(f32),
        w2=params["w2"].astype(bf16), b2=params["b2"].astype(f32),
        g1=params["g1"].astype(f32), be1=params["be1"].astype(f32),
        g2=params["g2"].astype(f32), be2=params["be2"].astype(f32),
    )


def reference_jax(src, params, nhead):
    """Pure-JAX f32 reference mirroring the PyTorch forward (eval mode)."""
    p = {k: v.astype(jnp.float32) for k, v in params.items()}
    B, L, D = src.shape
    Dh = D // nhead
    q = src @ p["wq"] + p["bq"][0]
    k = src @ p["wk"] + p["bk"][0]
    v = src @ p["wv"] + p["bv"][0]
    q = q.reshape(B, L, nhead, Dh).transpose(0, 2, 1, 3)
    k = k.reshape(B, L, nhead, Dh).transpose(0, 2, 1, 3)
    v = v.reshape(B, L, nhead, Dh).transpose(0, 2, 1, 3)
    s = jnp.einsum("bhqd,bhkd->bhqk", q, k) / math.sqrt(Dh)
    w = jax.nn.softmax(s, axis=-1)
    ctx = jnp.einsum("bhqk,bhkd->bhqd", w, v).transpose(0, 2, 1, 3).reshape(B, L, D)
    ao = ctx @ p["wo"] + p["bo"][0]
    s1 = src + ao
    n1 = (s1 - s1.mean(-1, keepdims=True)) / jnp.sqrt(s1.var(-1, keepdims=True) + 1e-5)
    n1 = n1 * p["g1"][0] + p["be1"][0]
    ff = jnp.maximum(n1 @ p["w1"] + p["b1"][0], 0.0) @ p["w2"] + p["b2"][0]
    s2 = n1 + ff
    n2 = (s2 - s2.mean(-1, keepdims=True)) / jnp.sqrt(s2.var(-1, keepdims=True) + 1e-5)
    n2 = n2 * p["g2"][0] + p["be2"][0]
    return n2, w.mean(axis=1)


if __name__ == "__main__":
    B, L, d_model, nhead, dim_ff = 2, 8, 32, 4, 64

    key = jax.random.PRNGKey(0)
    k_src, k_par = jax.random.split(key)
    src = jax.random.normal(k_src, (B, L, d_model), jnp.float32)
    params = init_params(k_par, d_model, nhead, dim_ff)
    prepared = prepare_params(params, nhead)            # one-time packing (hoisted)

    out, attn_w = transformer_encoder_layer(src, prepared, nhead=nhead, need_weights=True)
    out = jax.block_until_ready(out)
    attn_w = jax.block_until_ready(attn_w)

    ref_out, ref_w = reference_jax(src, params, nhead)
    assert out.shape == (B, L, d_model) and attn_w.shape == (B, L, L)
    # bf16 weights + bf16 matmul inputs (f32 accumulation) vs the full-f32 reference
    assert jnp.allclose(out, ref_out, atol=2e-2, rtol=2e-2)
    assert jnp.allclose(attn_w, ref_w, atol=5e-3, rtol=2e-2)

    # optional attention-weights path (skips the (B, L, L) output and its normalization)
    out_nw, w_none = transformer_encoder_layer(src, prepared, nhead=nhead, need_weights=False)
    out_nw = jax.block_until_ready(out_nw)
    assert w_none is None
    assert jnp.allclose(out_nw, ref_out, atol=2e-2, rtol=2e-2)

    print("KERNEL_OK")
</pallas_src>

<mosaic_0001>
module attributes {stable_mosaic.version = 11 : i64} {
  func.func @_qkv_kernel(%arg0: i32, %arg1: i32, %arg2: memref<16x32xf32, #tpu.memory_space<vmem>>, %arg3: memref<32x96xbf16, #tpu.memory_space<vmem>>, %arg4: memref<1x96xf32, #tpu.memory_space<vmem>>, %arg5: memref<16x96xbf16, #tpu.memory_space<vmem>>) attributes {dimension_semantics = [#tpu.dimension_semantics<parallel>, #tpu.dimension_semantics<parallel>], iteration_bounds = array<i64: 1, 1>, scalar_prefetch = 0 : i64, scratch_operands = 0 : i64, tpu.core_type = #tpu.core_type<tc>, window_params = [{transform_indices = @transform_0, window_bounds = array<i64: 16, 32>}, {transform_indices = @transform_1, window_bounds = array<i64: 32, 96>}, {transform_indices = @transform_2, window_bounds = array<i64: 1, 96>}, {transform_indices = @transform_3, window_bounds = array<i64: 16, 96>}]} {
    %c0 = arith.constant 0 : index
    %c0_0 = arith.constant 0 : index
    %0 = vector.load %arg2[%c0, %c0_0] : memref<16x32xf32, #tpu.memory_space<vmem>>, vector<16x32xf32>
    %1 = arith.truncf %0 : vector<16x32xf32> to vector<16x32xbf16>
    %c0_1 = arith.constant 0 : index
    %c0_2 = arith.constant 0 : index
    %2 = vector.load %arg3[%c0_1, %c0_2] : memref<32x96xbf16, #tpu.memory_space<vmem>>, vector<32x96xbf16>
    %cst = arith.constant dense<0.000000e+00> : vector<16x96xf32>
    %3 = tpu.matmul %1, %2, %cst {dimension_numbers = #tpu.dot_dimension_numbers<[1], [0], [0], [1], [0, 0, 1, 1], [], []>} : vector<16x32xbf16>, vector<32x96xbf16>, vector<16x96xf32> -> vector<16x96xf32>
    %c0_3 = arith.constant 0 : index
    %c0_4 = arith.constant 0 : index
    %4 = vector.load %arg4[%c0_3, %c0_4] : memref<1x96xf32, #tpu.memory_space<vmem>>, vector<1x96xf32>
    %5 = vector.broadcast %4 : vector<1x96xf32> to vector<16x96xf32>
    %6 = arith.addf %3, %5 : vector<16x96xf32>
    %7 = arith.truncf %6 : vector<16x96xf32> to vector<16x96xbf16>
    %c0_5 = arith.constant 0 : index
    %c0_6 = arith.constant 0 : index
    %8 = vector.load %arg5[%c0_5, %c0_6] : memref<16x96xbf16, #tpu.memory_space<vmem>>, vector<16x96xbf16>
    tpu.vector_store %arg5[%c0_5, %c0_6], %7 {strides = array<i32>} : memref<16x96xbf16, #tpu.memory_space<vmem>>, vector<16x96xbf16>,
    return
  }
  func.func @transform_0(%arg0: i32, %arg1: i32) -> (i32, i32) {
    %c0_i32 = arith.constant 0 : i32
    %c0_i32_0 = arith.constant 0 : i32
    return %arg0, %c0_i32 : i32, i32
  }
  func.func @transform_1(%arg0: i32, %arg1: i32) -> (i32, i32) {
    %c0_i32 = arith.constant 0 : i32
    %c0_i32_0 = arith.constant 0 : i32
    return %c0_i32, %arg1 : i32, i32
  }
  func.func @transform_2(%arg0: i32, %arg1: i32) -> (i32, i32) {
    %c0_i32 = arith.constant 0 : i32
    %c0_i32_0 = arith.constant 0 : i32
    return %c0_i32, %arg1 : i32, i32
  }
  func.func @transform_3(%arg0: i32, %arg1: i32) -> (i32, i32) {
    %c0_i32 = arith.constant 0 : i32
    return %arg0, %arg1 : i32, i32
  }
}

</mosaic_0001>

<llo_original>
// kernel: tpu_custom_call.1
$region0: #{tpu_custom_call.1}
  #allocation0 [shape = 'u32[]', space=smem, size = 0x4, offset = 0x4, fixed_abs, tag = 'smem constant byte address 0x4 - core index']
  #allocation1 [shape = 'u32[144,128]{1,0:T(1,128)}', space=vmem, size = 0x12000, scoped, tag = 'internal scratch']
  %s0 = inlined_call_operand.hbm [shape: f32[16,32], index: 0, kind: input, shape index: {}]
  %s1 = inlined_call_operand.hbm [shape: bf16[32,96], index: 1, kind: input, shape index: {}]
  %s2 = inlined_call_operand.vmem [shape: f32[1,96], index: 2, kind: input, shape index: {}]
  %s3 = inlined_call_operand.hbm [shape: bf16[16,96], index: 3, kind: output, shape index: {}]
  %s4 = sld [smem:[#allocation0]]
  $region30: #{tpu_custom_call.1} parent=0
    _
  %s6 = ssub.s32 1, %s4
  %s7 = scalar_select 0, %s6, %s4
  $region1: #{tpu_custom_call.1} parent=0
    #allocation2 [shape = 'u8[8192]{0}', space=vmem, size = 0x2000, scoped, tag = 'input window, operand 0, single buffered']
    #allocation3 [shape = 's32[1]{0}', space=sflag, size = 0x4, scoped, tag = 'scoped memory for tpu_custom_call.1']
    #allocation4 [shape = 's32[1]{0}', space=sflag, size = 0x4, scoped, tag = 'scoped memory for tpu_custom_call.1']
    #allocation5 [shape = 'u8[8192]{0}', space=vmem, size = 0x2000, scoped, tag = 'input window, operand 1, single buffered']
    #allocation6 [shape = 's32[1]{0}', space=sflag, size = 0x4, scoped, tag = 'scoped memory for tpu_custom_call.1']
    #allocation7 [shape = 'u8[4096]{0}', space=vmem, size = 0x1000, scoped, tag = 'output window, operand 0, single buffered']
    %8 = vsyncpa [#allocation3], 0
    %9 = vsyncpa [#allocation6], 0
    %10 = vsyncpa [#allocation4], 0
    // Predicated region
    $region2: #{tpu_custom_call.1} parent=1 // pred_check
      _
    $region3: #{tpu_custom_call.1} parent=1 // pred_check_branch
      %12 = sbr.rel (0) target = $region5
    $region4: #{tpu_custom_call.1} parent=1 // pred_region
      %s14 = ssub.s32 256, 256
      %15 = vsyncadd [#allocation3], %s14
      %s16 = sshll.u32 [#allocation2], 4
      %s17 = int_to_ptr.vmem [resolvable:$true] %s16
      %22 = dma.hbm_to_vmem [thread:$0]  %s0, 256, %s17, [#allocation3], 128, 128, 8
    $region5: #{tpu_custom_call.1} parent=1 // pred_fallthru
      _
    // Predicated region
    $region6: #{tpu_custom_call.1} parent=1 // pred_check
      _
    $region7: #{tpu_custom_call.1} parent=1 // pred_check_branch
      %24 = sbr.rel (0) target = $region9
    $region8: #{tpu_custom_call.1} parent=1 // pred_region
      %s26 = ssub.s32 256, 256
      %27 = vsyncadd [#allocation6], %s26
      %s28 = sshll.u32 [#allocation5], 4
      %s29 = int_to_ptr.vmem [resolvable:$true] %s28
      %34 = dma.hbm_to_vmem [thread:$0]  %s1, 256, %s29, [#allocation6], 64, 64, 4
    $region9: #{tpu_custom_call.1} parent=1 // pred_fallthru
      _
    // Predicated region
    $region10: #{tpu_custom_call.1} parent=1 // pred_check
      _
    $region11: #{tpu_custom_call.1} parent=1 // pred_check_branch
      %36 = sbr.rel (0) target = $region13
    $region12: #{tpu_custom_call.1} parent=1 // pred_region
      _
    $region13: #{tpu_custom_call.1} parent=1 // pred_fallthru
      _
    // Predicated region
    $region14: #{tpu_custom_call.1} parent=1 // pred_check
      _
    $region15: #{tpu_custom_call.1} parent=1 // pred_check_branch
      %38 = sbr.rel (0) target = $region17
    $region16: #{tpu_custom_call.1} parent=1 // pred_region
      %39 = dma.done [#allocation3], 256
    $region17: #{tpu_custom_call.1} parent=1 // pred_fallthru
      _
    // Predicated region
    $region18: #{tpu_custom_call.1} parent=1 // pred_check
      _
    $region19: #{tpu_custom_call.1} parent=1 // pred_check_branch
      %41 = sbr.rel (0) target = $region21
    $region20: #{tpu_custom_call.1} parent=1 // pred_region
      %42 = dma.done [#allocation6], 256
    $region21: #{tpu_custom_call.1} parent=1 // pred_fallthru
      _
    %v44 = vld [vmem:[#allocation2] sm:$0xff]
    %v45 = vld [vmem:[#allocation2 + $0x8] sm:$0xff]
    %v46 = vpack.c.bf16 %v45, %v44
    %v47 = vld [vmem:[#allocation5] sm:$0xf]
    %v48 = vld [vmem:[#allocation5 + $0x4] sm:$0xf]
    %v49 = vld [vmem:[#allocation5 + $0x8] sm:$0xf]
    %v50 = vld [vmem:[#allocation5 + $0xc] sm:$0xf]
    %v51 = vld [vmem:[%s2] sm:$0x1]
    %v53 = vlaneseq
    %v54 = vshrl.u32 %v53, 7
    %v55 = vsub.s32 0, %v54
    %v56 = vrot.slane %v51, %v55
    %v62 = vunpack.c.l.b16 %v47
    %v63 = vunpack.c.l.b16 %v48
    %v64 = vunpack.c.l.b16 %v49
    %v65 = vunpack.c.l.b16 %v50
    %v66 = vpack.c.b16 %v63, %v62
    %v67 = vpack.c.b16 %v65, %v64
    %vm70 = vcmask 261120
    %v72 = vsel %vm70, %v46, 0
    %74 = vmatprep.subr.bf16.mxu0 0
    %75 = vmatpush1.bf16.msra.mxu0 0
    %76 = vmatprep.subr.bf16.mxu0 0
    %77 = vmatpush1.bf16.msra.mxu0 0
    %78 = vmatprep.subr.bf16.mxu0 0
    %79 = vmatpush1.bf16.msra.mxu0 0
    %80 = vmatprep.subr.bf16.mxu0 0
    %81 = vmatpush1.bf16.msra.mxu0 0
    %82 = vmatprep.subr.bf16.mxu0 0
    %83 = vmatpush1.bf16.msra.mxu0 0
    %84 = vmatprep.subr.bf16.mxu0 0
    %85 = vmatpush1.bf16.msra.mxu0 0
    %86 = vmatprep.subr.bf16.mxu0 0
    %87 = vmatpush1.bf16.msra.mxu0 %v67
    %88 = vmatprep.subr.bf16.mxu0 0
    %89 = vmatpush1.bf16.msra.mxu0 %v66
    %90 = vmatprep.subr.bf16.mxu0 0
    %91 = vmatpush2.bf16.msra.mxu0 0
    %92 = vmatprep.subr.bf16.mxu0 0
    %93 = vmatpush2.bf16.msra.mxu0 0
    %94 = vmatprep.subr.bf16.mxu0 0
    %95 = vmatpush2.bf16.msra.mxu0 0
    %96 = vmatprep.subr.bf16.mxu0 0
    %97 = vmatpush2.bf16.msra.mxu0 0
    %98 = vmatprep.subr.bf16.mxu0 0
    %99 = vmatpush2.bf16.msra.mxu0 0
    %100 = vmatprep.subr.bf16.mxu0 0
    %101 = vmatpush2.bf16.msra.mxu0 0
    %102 = vmatprep.subr.bf16.mxu0 0
    %103 = vmatpush2.bf16.msra.mxu0 0
    %104 = vmatprep.subr.bf16.mxu0 0
    %105 = vmatpush2.bf16.msra.mxu0 0
    %106 = vmatprep.mubr.bf16.mxu0 0
    %107 = vmatmul.mubr.bf16.gmra.mxu0 %v72
    %v108 = vpop.f32.mrf.mxu0
    %v109 = vadd.f32 %v56, %v108
    %v110 = vpop.f32.mrf.mxu0
    %v111 = vpop.f32.mrf.mxu0
    %v112 = vadd.f32 %v56, %v111
    %v113 = vpop.f32.mrf.mxu0
    %114 = vdwg.mxu0
    %v115 = vpack.c.bf16 %v112, %v109
    %v117 = vunpack.c.l.b16 %v115
    %v118 = vunpack.c.h.b16 %v115
    %v119 = vpack.c.b16 %v117, %v117
    %v120 = vpack.c.b16 %v118, %v118
    %vm123 = vcmask 781312
    %124 = vst.msk [vmem:[#allocation7] sm:$0xf] %vm123, %v119
    %125 = vst.msk [vmem:[#allocation7 + $0x4] sm:$0xf] %vm123, %v120
    // Predicated region
    $region22: #{tpu_custom_call.1} parent=1 // pred_check
      _
    $region23: #{tpu_custom_call.1} parent=1 // pred_check_branch
      %127 = sbr.rel (0) target = $region25
    $region24: #{tpu_custom_call.1} parent=1 // pred_region
      %s129 = ssub.s32 128, 128
      %130 = vsyncadd [#allocation4], %s129
      %s131 = sshll.u32 [#allocation7], 4
      %s132 = int_to_ptr.vmem [resolvable:$true] %s131
      %137 = dma.vmem_to_hbm [thread:$0]  %s132, 128, %s3, [#allocation4], 64, 64, 4
    $region25: #{tpu_custom_call.1} parent=1 // pred_fallthru
      _
    // Predicated region
    $region26: #{tpu_custom_call.1} parent=1 // pred_check
      _
    $region27: #{tpu_custom_call.1} parent=1 // pred_check_branch
      %139 = sbr.rel (0) target = $region29
    $region28: #{tpu_custom_call.1} parent=1 // pred_region
      %140 = dma.done [#allocation4], 128
    $region29: #{tpu_custom_call.1} parent=1 // pred_fallthru
      _
    %141 = vsyncpa [#allocation3], 1
    %142 = vsyncpa [#allocation6], 1
    %143 = vsyncpa [#allocation4], 1

</llo_original>
